<compile_context>
chip_gen: v5e
topology: v5e:2x2
jax: 0.10.0
libtpu: 0.0.40
codegen_flags: <defaults>
</compile_context>

<pallas_src>
import functools

import jax
import jax.numpy as jnp
from jax.experimental import pallas as pl
from jax.experimental.pallas import tpu as pltpu

N_OUT = 300          # logical fc2 output features
N_PAD = 384          # padded to 3*128 lanes for unmasked stores
K_IN = 28 * 28       # flattened input features after fusing fc1 into fc2


def net_kernel(x_ref, w_ref, b_ref, o_ref):
    # x_ref : (TB, 784)   bf16 flattened input tile (pipelined over batch)
    # w_ref : (784, 384)  bf16 fused weight  (resident across grid steps)
    # b_ref : (1, 384)    f32  fused bias    (resident across grid steps)
    # o_ref : (TB, 384)   f32  output tile
    z = jnp.dot(x_ref[...], w_ref[...], preferred_element_type=jnp.float32)
    o_ref[...] = jnp.maximum(z + b_ref[...], 0.0)


def fuse_params(w1, b1, w2, b2):
    """Fold fc1 into fc2 so the kernel is a single matmul.

    W_eff[k*28 + m, n] = w1[0, m] * w2[n, k]
    b_eff[n]           = b1 * sum_k w2[n, k] + b2[n]
    Zero-padded on N from 300 -> 384; W_eff cast to bf16 (f32 accumulation
    happens on the MXU), b_eff kept f32.
    Call once per weight set (hoisted out of the forward pass).
    """
    w1f = w1.reshape(28).astype(jnp.float32)                      # (28,)
    w2f = w2.astype(jnp.float32)                                   # (300, 28)
    w_eff = (w1f[None, :, None] * w2f.T[:, None, :]).reshape(K_IN, N_OUT)
    b_eff = (b1.reshape(()).astype(jnp.float32) * w2f.sum(axis=1)
             + b2.astype(jnp.float32)).reshape(1, N_OUT)
    w_eff = jnp.pad(w_eff, ((0, 0), (0, N_PAD - N_OUT))).astype(jnp.bfloat16)
    b_eff = jnp.pad(b_eff, ((0, 0), (0, N_PAD - N_OUT)))           # (1, 384) f32
    return w_eff, b_eff


@functools.partial(jax.jit, static_argnames=("tb_target",))
def net_forward(x, w_eff, b_eff, *, tb_target=2048):
    """x: (B, 28, 28) f32 -> (B, 300) f32. w_eff/b_eff come from fuse_params."""
    B = x.shape[0]
    x_flat = x.reshape(B, K_IN).astype(jnp.bfloat16)   # lane-dense rows, half HBM bytes

    # Batch tile selection:
    #  - large B: TB = tb_target (amortizes per-grid-step overhead, ~14 MB VMEM)
    #  - medium B: split into >=2 sublane-aligned blocks so v7x's 2 TCs share work
    #  - tiny B: single full-batch block
    if B >= tb_target:
        TB = tb_target
    elif B > 8:
        TB = ((-(-B // 2) + 7) // 8) * 8
    else:
        TB = B
    grid = (pl.cdiv(B, TB),)

    out_padded = pl.pallas_call(
        net_kernel,
        out_shape=jax.ShapeDtypeStruct((B, N_PAD), jnp.float32),
        grid=grid,
        in_specs=[
            pl.BlockSpec((TB, K_IN), lambda i: (i, 0)),      # x: tiled over batch
            pl.BlockSpec((K_IN, N_PAD), lambda i: (0, 0)),   # W_eff: resident
            pl.BlockSpec((1, N_PAD), lambda i: (0, 0)),      # b_eff: resident
        ],
        out_specs=pl.BlockSpec((TB, N_PAD), lambda i: (i, 0)),
        compiler_params=pltpu.CompilerParams(
            dimension_semantics=("parallel",),               # both TCs on v7x
            vmem_limit_bytes=32 * 1024 * 1024,
        ),
    )(x_flat, w_eff, b_eff)

    return out_padded[:, :N_OUT]


def _reference(x, w1, b1, w2, b2):
    # Pure-JAX f32 reference mirroring the PyTorch forward exactly (un-fused).
    y1 = jnp.einsum("bkm,om->bko", x, w1) + b1       # fc1 -> (B, 28, 1)
    y1 = y1.reshape(-1, 28)                          # view(-1, 28) -> (B, 28)
    return jax.nn.relu(y1 @ w2.T + b2)               # fc2 + relu -> (B, 300)


if __name__ == "__main__":
    key = jax.random.PRNGKey(0)
    kx, k1w, k1b, k2w, k2b = jax.random.split(key, 5)

    B = 2
    x = jax.random.normal(kx, (B, 28, 28), dtype=jnp.float32)

    # PyTorch nn.Linear default init: U(-1/sqrt(in), 1/sqrt(in)), in=28.
    bound = 1.0 / jnp.sqrt(28.0)
    w1 = jax.random.uniform(k1w, (1, 28), jnp.float32, -bound, bound)
    b1 = jax.random.uniform(k1b, (1,), jnp.float32, -bound, bound)
    w2 = jax.random.uniform(k2w, (300, 28), jnp.float32, -bound, bound)
    b2 = jax.random.uniform(k2b, (300,), jnp.float32, -bound, bound)

    # Fused params computed once (hoisted out of the forward pass).
    w_eff, b_eff = fuse_params(w1, b1, w2, b2)

    out = net_forward(x, w_eff, b_eff)
    out = jax.block_until_ready(out)

    ref = _reference(x, w1, b1, w2, b2)
    assert out.shape == (B, 300), out.shape
    # bf16 inputs/weights with f32 accumulation: loosened tolerance vs f32 ref.
    assert jnp.allclose(out, ref, atol=2e-2, rtol=2e-2), "mismatch vs reference"

    print("KERNEL_OK")
</pallas_src>

<mosaic_0001>
module attributes {stable_mosaic.version = 11 : i64} {
  func.func @net_kernel(%arg0: i32, %arg1: memref<2x784xbf16, #tpu.memory_space<vmem>>, %arg2: memref<784x384xbf16, #tpu.memory_space<vmem>>, %arg3: memref<1x384xf32, #tpu.memory_space<vmem>>, %arg4: memref<2x384xf32, #tpu.memory_space<vmem>>) attributes {dimension_semantics = [#tpu.dimension_semantics<parallel>], iteration_bounds = array<i64: 1>, scalar_prefetch = 0 : i64, scratch_operands = 0 : i64, tpu.core_type = #tpu.core_type<tc>, window_params = [{transform_indices = @transform_0, window_bounds = array<i64: 2, 784>}, {pipeline_mode = #tpu.pipeline_mode<synchronous>, transform_indices = @transform_1, window_bounds = array<i64: 784, 384>}, {pipeline_mode = #tpu.pipeline_mode<synchronous>, transform_indices = @transform_2, window_bounds = array<i64: 1, 384>}, {transform_indices = @transform_3, window_bounds = array<i64: 2, 384>}]} {
    %c0 = arith.constant 0 : index
    %c0_0 = arith.constant 0 : index
    %0 = vector.load %arg1[%c0, %c0_0] : memref<2x784xbf16, #tpu.memory_space<vmem>>, vector<2x784xbf16>
    %c0_1 = arith.constant 0 : index
    %c0_2 = arith.constant 0 : index
    %1 = vector.load %arg2[%c0_1, %c0_2] : memref<784x384xbf16, #tpu.memory_space<vmem>>, vector<784x384xbf16>
    %cst = arith.constant dense<0.000000e+00> : vector<2x384xf32>
    %2 = tpu.matmul %0, %1, %cst {dimension_numbers = #tpu.dot_dimension_numbers<[1], [0], [0], [1], [0, 0, 1, 1], [], []>} : vector<2x784xbf16>, vector<784x384xbf16>, vector<2x384xf32> -> vector<2x384xf32>
    %c0_3 = arith.constant 0 : index
    %c0_4 = arith.constant 0 : index
    %3 = vector.load %arg3[%c0_3, %c0_4] : memref<1x384xf32, #tpu.memory_space<vmem>>, vector<1x384xf32>
    %4 = vector.broadcast %3 : vector<1x384xf32> to vector<2x384xf32>
    %5 = arith.addf %2, %4 : vector<2x384xf32>
    %cst_5 = arith.constant 0.000000e+00 : f32
    %6 = vector.broadcast %cst_5 : f32 to vector<2x384xf32>
    %7 = arith.maximumf %5, %6 : vector<2x384xf32>
    %c0_6 = arith.constant 0 : index
    %c0_7 = arith.constant 0 : index
    %8 = vector.load %arg4[%c0_6, %c0_7] : memref<2x384xf32, #tpu.memory_space<vmem>>, vector<2x384xf32>
    tpu.vector_store %arg4[%c0_6, %c0_7], %7 {strides = array<i32>} : memref<2x384xf32, #tpu.memory_space<vmem>>, vector<2x384xf32>,
    return
  }
  func.func @transform_0(%arg0: i32) -> (i32, i32) {
    %c0_i32 = arith.constant 0 : i32
    %c0_i32_0 = arith.constant 0 : i32
    return %arg0, %c0_i32 : i32, i32
  }
  func.func @transform_1(%arg0: i32) -> (i32, i32) {
    %c0_i32 = arith.constant 0 : i32
    %c0_i32_0 = arith.constant 0 : i32
    %c0_i32_1 = arith.constant 0 : i32
    return %c0_i32, %c0_i32_0 : i32, i32
  }
  func.func @transform_2(%arg0: i32) -> (i32, i32) {
    %c0_i32 = arith.constant 0 : i32
    %c0_i32_0 = arith.constant 0 : i32
    %c0_i32_1 = arith.constant 0 : i32
    return %c0_i32, %c0_i32_0 : i32, i32
  }
  func.func @transform_3(%arg0: i32) -> (i32, i32) {
    %c0_i32 = arith.constant 0 : i32
    %c0_i32_0 = arith.constant 0 : i32
    return %arg0, %c0_i32 : i32, i32
  }
}

</mosaic_0001>

<llo_original>
// kernel: net_forward.1
$region0: #{net_forward.1}
  #allocation0 [shape = 'u32[]', space=smem, size = 0x4, offset = 0x4, fixed_abs, tag = 'smem constant byte address 0x4 - core index']
  #allocation1 [shape = 'u32[72,128]{1,0:T(1,128)}', space=vmem, size = 0x9000, scoped, tag = 'internal scratch']
  %s0 = inlined_call_operand.vmem [shape: bf16[2,784], index: 0, kind: input, shape index: {}]
  %s1 = inlined_call_operand.hbm [shape: bf16[784,384], index: 1, kind: input, shape index: {}]
  %s2 = inlined_call_operand.vmem [shape: f32[1,384], index: 2, kind: input, shape index: {}]
  %s3 = inlined_call_operand.hbm [shape: f32[2,384], index: 3, kind: output, shape index: {}]
  %s4 = sld [smem:[#allocation0]]
  $region26: #{net_forward.1} parent=0
    _
  %s6 = ssub.s32 1, %s4
  %s7 = scalar_select 0, %s6, %s4
  $region1: #{net_forward.1} parent=0
    #allocation2 [shape = 'u8[602112]{0}', space=vmem, size = 0x93000, scoped, tag = 'input window, operand 1, single buffered']
    #allocation3 [shape = 's32[1]{0}', space=sflag, size = 0x4, scoped, tag = 'scoped memory for net_forward.1']
    #allocation4 [shape = 's32[1]{0}', space=sflag, size = 0x4, scoped, tag = 'scoped memory for net_forward.1']
    #allocation5 [shape = 'u8[3072]{0}', space=vmem, size = 0xc00, scoped, tag = 'output window, operand 0, single buffered']
    %8 = vsyncpa [#allocation3], 0
    %9 = vsyncpa [#allocation4], 0
    // Predicated region
    $region2: #{net_forward.1} parent=1 // pred_check
      _
    $region3: #{net_forward.1} parent=1 // pred_check_branch
      %11 = sbr.rel (0) target = $region5
    $region4: #{net_forward.1} parent=1 // pred_region
      _
    $region5: #{net_forward.1} parent=1 // pred_fallthru
      _
    // Predicated region
    $region6: #{net_forward.1} parent=1 // pred_check
      _
    $region7: #{net_forward.1} parent=1 // pred_check_branch
      %13 = sbr.rel (0) target = $region9
    $region8: #{net_forward.1} parent=1 // pred_region
      %15 = vsyncadd [#allocation3], 0
      %s16 = sshll.u32 %s1, 4
      %s17 = int_to_ptr.hbm [resolvable:$true] %s16
      %s18 = sshll.u32 [#allocation2], 4
      %s19 = int_to_ptr.vmem [resolvable:$true] %s18
      %24 = dma.hbm_to_vmem [thread:$0]  %s17, 18816, %s19, [#allocation3], 192, 192, 12
    $region9: #{net_forward.1} parent=1 // pred_fallthru
      _
    // Predicated region
    $region10: #{net_forward.1} parent=1 // pred_check
      _
    $region11: #{net_forward.1} parent=1 // pred_check_branch
      %26 = sbr.rel (0) target = $region13
    $region12: #{net_forward.1} parent=1 // pred_region
      _
    $region13: #{net_forward.1} parent=1 // pred_fallthru
      _
    // Predicated region
    $region14: #{net_forward.1} parent=1 // pred_check
      _
    $region15: #{net_forward.1} parent=1 // pred_check_branch
      %28 = sbr.rel (0) target = $region17
    $region16: #{net_forward.1} parent=1 // pred_region
      %30 = dma.done [#allocation3], 18816
    $region17: #{net_forward.1} parent=1 // pred_fallthru
      _
    %v32 = vld [vmem:[%s0] sm:$0x7f]
    %v33 = vld [vmem:[#allocation2] sm:$0xff]
    %v34 = vld [vmem:[#allocation2 + $0x8] sm:$0xf]
    %v35 = vld [vmem:[#allocation2 + $0xc] sm:$0xff]
    %v36 = vld [vmem:[#allocation2 + $0x14] sm:$0xf]
    %v37 = vld [vmem:[#allocation2 + $0x18] sm:$0xff]
    %v38 = vld [vmem:[#allocation2 + $0x20] sm:$0xf]
    %v39 = vld [vmem:[#allocation2 + $0x24] sm:$0xff]
    %v40 = vld [vmem:[#allocation2 + $0x2c] sm:$0xf]
    %v41 = vld [vmem:[#allocation2 + $0x30] sm:$0xff]
    %v42 = vld [vmem:[#allocation2 + $0x38] sm:$0xf]
    %v43 = vld [vmem:[#allocation2 + $0x3c] sm:$0xff]
    %v44 = vld [vmem:[#allocation2 + $0x44] sm:$0xf]
    %v45 = vld [vmem:[#allocation2 + $0x48] sm:$0xff]
    %v46 = vld [vmem:[#allocation2 + $0x50] sm:$0xf]
    %v47 = vld [vmem:[#allocation2 + $0x54] sm:$0xff]
    %v48 = vld [vmem:[#allocation2 + $0x5c] sm:$0xf]
    %v49 = vld [vmem:[#allocation2 + $0x60] sm:$0xff]
    %v50 = vld [vmem:[#allocation2 + $0x68] sm:$0xf]
    %v51 = vld [vmem:[#allocation2 + $0x6c] sm:$0xff]
    %v52 = vld [vmem:[#allocation2 + $0x74] sm:$0xf]
    %v53 = vld [vmem:[#allocation2 + $0x78] sm:$0xff]
    %v54 = vld [vmem:[#allocation2 + $0x80] sm:$0xf]
    %v55 = vld [vmem:[#allocation2 + $0x84] sm:$0xff]
    %v56 = vld [vmem:[#allocation2 + $0x8c] sm:$0xf]
    %v57 = vld [vmem:[#allocation2 + $0x90] sm:$0xff]
    %v58 = vld [vmem:[#allocation2 + $0x98] sm:$0xf]
    %v59 = vld [vmem:[#allocation2 + $0x9c] sm:$0xff]
    %v60 = vld [vmem:[#allocation2 + $0xa4] sm:$0xf]
    %v61 = vld [vmem:[#allocation2 + $0xa8] sm:$0xff]
    %v62 = vld [vmem:[#allocation2 + $0xb0] sm:$0xf]
    %v63 = vld [vmem:[#allocation2 + $0xb4] sm:$0xff]
    %v64 = vld [vmem:[#allocation2 + $0xbc] sm:$0xf]
    %v65 = vld [vmem:[#allocation2 + $0xc0] sm:$0xff]
    %v66 = vld [vmem:[#allocation2 + $0xc8] sm:$0xf]
    %v67 = vld [vmem:[#allocation2 + $0xcc] sm:$0xff]
    %v68 = vld [vmem:[#allocation2 + $0xd4] sm:$0xf]
    %v69 = vld [vmem:[#allocation2 + $0xd8] sm:$0xff]
    %v70 = vld [vmem:[#allocation2 + $0xe0] sm:$0xf]
    %v71 = vld [vmem:[#allocation2 + $0xe4] sm:$0xff]
    %v72 = vld [vmem:[#allocation2 + $0xec] sm:$0xf]
    %v73 = vld [vmem:[#allocation2 + $0xf0] sm:$0xff]
    %v74 = vld [vmem:[#allocation2 + $0xf8] sm:$0xf]
    %v75 = vld [vmem:[#allocation2 + $0xfc] sm:$0xff]
    %v76 = vld [vmem:[#allocation2 + $0x104] sm:$0xf]
    %v77 = vld [vmem:[#allocation2 + $0x108] sm:$0xff]
    %v78 = vld [vmem:[#allocation2 + $0x110] sm:$0xf]
    %v79 = vld [vmem:[#allocation2 + $0x114] sm:$0xff]
    %v80 = vld [vmem:[#allocation2 + $0x11c] sm:$0xf]
    %v81 = vld [vmem:[#allocation2 + $0x120] sm:$0xff]
    %v82 = vld [vmem:[#allocation2 + $0x128] sm:$0xf]
    %v83 = vld [vmem:[#allocation2 + $0x12c] sm:$0xff]
    %v84 = vld [vmem:[#allocation2 + $0x134] sm:$0xf]
    %v85 = vld [vmem:[#allocation2 + $0x138] sm:$0xff]
    %v86 = vld [vmem:[#allocation2 + $0x140] sm:$0xf]
    %v87 = vld [vmem:[#allocation2 + $0x144] sm:$0xff]
    %v88 = vld [vmem:[#allocation2 + $0x14c] sm:$0xf]
    %v89 = vld [vmem:[#allocation2 + $0x150] sm:$0xff]
    %v90 = vld [vmem:[#allocation2 + $0x158] sm:$0xf]
    %v91 = vld [vmem:[#allocation2 + $0x15c] sm:$0xff]
    %v92 = vld [vmem:[#allocation2 + $0x164] sm:$0xf]
    %v93 = vld [vmem:[#allocation2 + $0x168] sm:$0xff]
    %v94 = vld [vmem:[#allocation2 + $0x170] sm:$0xf]
    %v95 = vld [vmem:[#allocation2 + $0x174] sm:$0xff]
    %v96 = vld [vmem:[#allocation2 + $0x17c] sm:$0xf]
    %v97 = vld [vmem:[#allocation2 + $0x180] sm:$0xff]
    %v98 = vld [vmem:[#allocation2 + $0x188] sm:$0xf]
    %v99 = vld [vmem:[#allocation2 + $0x18c] sm:$0xff]
    %v100 = vld [vmem:[#allocation2 + $0x194] sm:$0xf]
    %v101 = vld [vmem:[#allocation2 + $0x198] sm:$0xff]
    %v102 = vld [vmem:[#allocation2 + $0x1a0] sm:$0xf]
    %v103 = vld [vmem:[#allocation2 + $0x1a4] sm:$0xff]
    %v104 = vld [vmem:[#allocation2 + $0x1ac] sm:$0xf]
    %v105 = vld [vmem:[#allocation2 + $0x1b0] sm:$0xff]
    %v106 = vld [vmem:[#allocation2 + $0x1b8] sm:$0xf]
    %v107 = vld [vmem:[#allocation2 + $0x1bc] sm:$0xff]
    %v108 = vld [vmem:[#allocation2 + $0x1c4] sm:$0xf]
    %v109 = vld [vmem:[#allocation2 + $0x1c8] sm:$0xff]
    %v110 = vld [vmem:[#allocation2 + $0x1d0] sm:$0xf]
    %v111 = vld [vmem:[#allocation2 + $0x1d4] sm:$0xff]
    %v112 = vld [vmem:[#allocation2 + $0x1dc] sm:$0xf]
    %v113 = vld [vmem:[#allocation2 + $0x1e0] sm:$0xff]
    %v114 = vld [vmem:[#allocation2 + $0x1e8] sm:$0xf]
    %v115 = vld [vmem:[#allocation2 + $0x1ec] sm:$0xff]
    %v116 = vld [vmem:[#allocation2 + $0x1f4] sm:$0xf]
    %v117 = vld [vmem:[#allocation2 + $0x1f8] sm:$0xff]
    %v118 = vld [vmem:[#allocation2 + $0x200] sm:$0xf]
    %v119 = vld [vmem:[#allocation2 + $0x204] sm:$0xff]
    %v120 = vld [vmem:[#allocation2 + $0x20c] sm:$0xf]
    %v121 = vld [vmem:[#allocation2 + $0x210] sm:$0xff]
    %v122 = vld [vmem:[#allocation2 + $0x218] sm:$0xf]
    %v123 = vld [vmem:[#allocation2 + $0x21c] sm:$0xff]
    %v124 = vld [vmem:[#allocation2 + $0x224] sm:$0xf]
    %v125 = vld [vmem:[#allocation2 + $0x228] sm:$0xff]
    %v126 = vld [vmem:[#allocation2 + $0x230] sm:$0xf]
    %v127 = vld [vmem:[#allocation2 + $0x234] sm:$0xff]
    %v128 = vld [vmem:[#allocation2 + $0x23c] sm:$0xf]
    %v129 = vld [vmem:[#allocation2 + $0x240] sm:$0xff]
    %v130 = vld [vmem:[#allocation2 + $0x248] sm:$0xf]
    %v131 = vld [vmem:[#allocation2 + $0x24c] sm:$0xff]
    %v132 = vld [vmem:[#allocation2 + $0x254] sm:$0xf]
    %v133 = vld [vmem:[#allocation2 + $0x258] sm:$0xff]
    %v134 = vld [vmem:[#allocation2 + $0x260] sm:$0xf]
    %v135 = vld [vmem:[#allocation2 + $0x264] sm:$0xff]
    %v136 = vld [vmem:[#allocation2 + $0x26c] sm:$0xf]
    %v137 = vld [vmem:[#allocation2 + $0x270] sm:$0xff]
    %v138 = vld [vmem:[#allocation2 + $0x278] sm:$0xf]
    %v139 = vld [vmem:[#allocation2 + $0x27c] sm:$0xff]
    %v140 = vld [vmem:[#allocation2 + $0x284] sm:$0xf]
    %v141 = vld [vmem:[#allocation2 + $0x288] sm:$0xff]
    %v142 = vld [vmem:[#allocation2 + $0x290] sm:$0xf]
    %v143 = vld [vmem:[#allocation2 + $0x294] sm:$0xff]
    %v144 = vld [vmem:[#allocation2 + $0x29c] sm:$0xf]
    %v145 = vld [vmem:[#allocation2 + $0x2a0] sm:$0xff]
    %v146 = vld [vmem:[#allocation2 + $0x2a8] sm:$0xf]
    %v147 = vld [vmem:[#allocation2 + $0x2ac] sm:$0xff]
    %v148 = vld [vmem:[#allocation2 + $0x2b4] sm:$0xf]
    %v149 = vld [vmem:[#allocation2 + $0x2b8] sm:$0xff]
    %v150 = vld [vmem:[#allocation2 + $0x2c0] sm:$0xf]
    %v151 = vld [vmem:[#allocation2 + $0x2c4] sm:$0xff]
    %v152 = vld [vmem:[#allocation2 + $0x2cc] sm:$0xf]
    %v153 = vld [vmem:[#allocation2 + $0x2d0] sm:$0xff]
    %v154 = vld [vmem:[#allocation2 + $0x2d8] sm:$0xf]
    %v155 = vld [vmem:[#allocation2 + $0x2dc] sm:$0xff]
    %v156 = vld [vmem:[#allocation2 + $0x2e4] sm:$0xf]
    %v157 = vld [vmem:[#allocation2 + $0x2e8] sm:$0xff]
    %v158 = vld [vmem:[#allocation2 + $0x2f0] sm:$0xf]
    %v159 = vld [vmem:[#allocation2 + $0x2f4] sm:$0xff]
    %v160 = vld [vmem:[#allocation2 + $0x2fc] sm:$0xf]
    %v161 = vld [vmem:[#allocation2 + $0x300] sm:$0xff]
    %v162 = vld [vmem:[#allocation2 + $0x308] sm:$0xf]
    %v163 = vld [vmem:[#allocation2 + $0x30c] sm:$0xff]
    %v164 = vld [vmem:[#allocation2 + $0x314] sm:$0xf]
    %v165 = vld [vmem:[#allocation2 + $0x318] sm:$0xff]
    %v166 = vld [vmem:[#allocation2 + $0x320] sm:$0xf]
    %v167 = vld [vmem:[#allocation2 + $0x324] sm:$0xff]
    %v168 = vld [vmem:[#allocation2 + $0x32c] sm:$0xf]
    %v169 = vld [vmem:[#allocation2 + $0x330] sm:$0xff]
    %v170 = vld [vmem:[#allocation2 + $0x338] sm:$0xf]
    %v171 = vld [vmem:[#allocation2 + $0x33c] sm:$0xff]
    %v172 = vld [vmem:[#allocation2 + $0x344] sm:$0xf]
    %v173 = vld [vmem:[#allocation2 + $0x348] sm:$0xff]
    %v174 = vld [vmem:[#allocation2 + $0x350] sm:$0xf]
    %v175 = vld [vmem:[#allocation2 + $0x354] sm:$0xff]
    %v176 = vld [vmem:[#allocation2 + $0x35c] sm:$0xf]
    %v177 = vld [vmem:[#allocation2 + $0x360] sm:$0xff]
    %v178 = vld [vmem:[#allocation2 + $0x368] sm:$0xf]
    %v179 = vld [vmem:[#allocation2 + $0x36c] sm:$0xff]
    %v180 = vld [vmem:[#allocation2 + $0x374] sm:$0xf]
    %v181 = vld [vmem:[#allocation2 + $0x378] sm:$0xff]
    %v182 = vld [vmem:[#allocation2 + $0x380] sm:$0xf]
    %v183 = vld [vmem:[#allocation2 + $0x384] sm:$0xff]
    %v184 = vld [vmem:[#allocation2 + $0x38c] sm:$0xf]
    %v185 = vld [vmem:[#allocation2 + $0x390] sm:$0xff]
    %v186 = vld [vmem:[#allocation2 + $0x398] sm:$0xf]
    %v187 = vld [vmem:[#allocation2 + $0x39c] sm:$0xff]
    %v188 = vld [vmem:[#allocation2 + $0x3a4] sm:$0xf]
    %v189 = vld [vmem:[#allocation2 + $0x3a8] sm:$0xff]
    %v190 = vld [vmem:[#allocation2 + $0x3b0] sm:$0xf]
    %v191 = vld [vmem:[#allocation2 + $0x3b4] sm:$0xff]
    %v192 = vld [vmem:[#allocation2 + $0x3bc] sm:$0xf]
    %v193 = vld [vmem:[#allocation2 + $0x3c0] sm:$0xff]
    %v194 = vld [vmem:[#allocation2 + $0x3c8] sm:$0xf]
    %v195 = vld [vmem:[#allocation2 + $0x3cc] sm:$0xff]
    %v196 = vld [vmem:[#allocation2 + $0x3d4] sm:$0xf]
    %v197 = vld [vmem:[#allocation2 + $0x3d8] sm:$0xff]
    %v198 = vld [vmem:[#allocation2 + $0x3e0] sm:$0xf]
    %v199 = vld [vmem:[#allocation2 + $0x3e4] sm:$0xff]
    %v200 = vld [vmem:[#allocation2 + $0x3ec] sm:$0xf]
    %v201 = vld [vmem:[#allocation2 + $0x3f0] sm:$0xff]
    %v202 = vld [vmem:[#allocation2 + $0x3f8] sm:$0xf]
    %v203 = vld [vmem:[#allocation2 + $0x3fc] sm:$0xff]
    %v204 = vld [vmem:[#allocation2 + $0x404] sm:$0xf]
    %v205 = vld [vmem:[#allocation2 + $0x408] sm:$0xff]
    %v206 = vld [vmem:[#allocation2 + $0x410] sm:$0xf]
    %v207 = vld [vmem:[#allocation2 + $0x414] sm:$0xff]
    %v208 = vld [vmem:[#allocation2 + $0x41c] sm:$0xf]
    %v209 = vld [vmem:[#allocation2 + $0x420] sm:$0xff]
    %v210 = vld [vmem:[#allocation2 + $0x428] sm:$0xf]
    %v211 = vld [vmem:[#allocation2 + $0x42c] sm:$0xff]
    %v212 = vld [vmem:[#allocation2 + $0x434] sm:$0xf]
    %v213 = vld [vmem:[#allocation2 + $0x438] sm:$0xff]
    %v214 = vld [vmem:[#allocation2 + $0x440] sm:$0xf]
    %v215 = vld [vmem:[#allocation2 + $0x444] sm:$0xff]
    %v216 = vld [vmem:[#allocation2 + $0x44c] sm:$0xf]
    %v217 = vld [vmem:[#allocation2 + $0x450] sm:$0xff]
    %v218 = vld [vmem:[#allocation2 + $0x458] sm:$0xf]
    %v219 = vld [vmem:[#allocation2 + $0x45c] sm:$0xff]
    %v220 = vld [vmem:[#allocation2 + $0x464] sm:$0xf]
    %v221 = vld [vmem:[#allocation2 + $0x468] sm:$0xff]
    %v222 = vld [vmem:[#allocation2 + $0x470] sm:$0xf]
    %v223 = vld [vmem:[#allocation2 + $0x474] sm:$0xff]
    %v224 = vld [vmem:[#allocation2 + $0x47c] sm:$0xf]
    %v225 = vld [vmem:[#allocation2 + $0x480] sm:$0xff]
    %v226 = vld [vmem:[#allocation2 + $0x488] sm:$0xf]
    %v227 = vld [vmem:[#allocation2 + $0x48c] sm:$0xff]
    %v228 = vld [vmem:[#allocation2 + $0x494] sm:$0xf]
    %v229 = vld [vmem:[%s2] sm:$0x7]
    %v231 = vperm.slane %v229, 0
    %v232 = vperm.slane %v229, 1
    %v233 = vperm.slane %v229, 2
    %238 = vst [vmem:[#allocation1] ss:$9 sm:$0xff] %v32
    %v239 = vld [vmem:[#allocation1] sm:$0xff]
    %v240 = vld [vmem:[#allocation1 + $0x9] sm:$0xff]
    %v241 = vld [vmem:[#allocation1 + $0x12] sm:$0xff]
    %v242 = vld [vmem:[#allocation1 + $0x1b] sm:$0xff]
    %v243 = vld [vmem:[#allocation1 + $0x24] sm:$0xff]
    %v244 = vld [vmem:[#allocation1 + $0x2d] sm:$0xff]
    %v245 = vld [vmem:[#allocation1 + $0x36] sm:$0xff]
    %v448 = vunpack.c.l.b16 %v33
    %v449 = vunpack.c.h.b16 %v33
    %v450 = vunpack.c.l.b16 %v34
    %v451 = vunpack.c.l.b16 %v35
    %v452 = vunpack.c.h.b16 %v35
    %v453 = vunpack.c.l.b16 %v36
    %v454 = vunpack.c.l.b16 %v37
    %v455 = vunpack.c.h.b16 %v37
    %v456 = vunpack.c.l.b16 %v38
    %v457 = vunpack.c.l.b16 %v39
    %v458 = vunpack.c.h.b16 %v39
    %v459 = vunpack.c.l.b16 %v40
    %v460 = vunpack.c.l.b16 %v41
    %v461 = vunpack.c.h.b16 %v41
    %v462 = vunpack.c.l.b16 %v42
    %v463 = vunpack.c.l.b16 %v43
    %v464 = vunpack.c.h.b16 %v43
    %v465 = vunpack.c.l.b16 %v44
    %v466 = vunpack.c.l.b16 %v45
    %v467 = vunpack.c.h.b16 %v45
    %v468 = vunpack.c.l.b16 %v46
    %v469 = vunpack.c.l.b16 %v47
    %v470 = vunpack.c.h.b16 %v47
    %v471 = vunpack.c.l.b16 %v48
    %v472 = vunpack.c.l.b16 %v49
    %v473 = vunpack.c.h.b16 %v49
    %v474 = vunpack.c.l.b16 %v50
    %v475 = vunpack.c.l.b16 %v51
    %v476 = vunpack.c.h.b16 %v51
    %v477 = vunpack.c.l.b16 %v52
    %v478 = vunpack.c.l.b16 %v53
    %v479 = vunpack.c.h.b16 %v53
    %v480 = vunpack.c.l.b16 %v54
    %v481 = vunpack.c.l.b16 %v55
    %v482 = vunpack.c.h.b16 %v55
    %v483 = vunpack.c.l.b16 %v56
    %v484 = vunpack.c.l.b16 %v57
    %v485 = vunpack.c.h.b16 %v57
    %v486 = vunpack.c.l.b16 %v58
    %v487 = vunpack.c.l.b16 %v59
    %v488 = vunpack.c.h.b16 %v59
    %v489 = vunpack.c.l.b16 %v60
    %v490 = vunpack.c.l.b16 %v61
    %v491 = vunpack.c.h.b16 %v61
    %v492 = vunpack.c.l.b16 %v62
    %v493 = vunpack.c.l.b16 %v63
    %v494 = vunpack.c.h.b16 %v63
    %v495 = vunpack.c.l.b16 %v64
    %v496 = vunpack.c.l.b16 %v65
    %v497 = vunpack.c.h.b16 %v65
    %v498 = vunpack.c.l.b16 %v66
    %v499 = vunpack.c.l.b16 %v67
    %v500 = vunpack.c.h.b16 %v67
    %v501 = vunpack.c.l.b16 %v68
    %v502 = vunpack.c.l.b16 %v69
    %v503 = vunpack.c.h.b16 %v69
    %v504 = vunpack.c.l.b16 %v70
    %v505 = vunpack.c.l.b16 %v71
    %v506 = vunpack.c.h.b16 %v71
    %v507 = vunpack.c.l.b16 %v72
    %v508 = vunpack.c.l.b16 %v73
    %v509 = vunpack.c.h.b16 %v73
    %v510 = vunpack.c.l.b16 %v74
    %v511 = vunpack.c.l.b16 %v75
    %v512 = vunpack.c.h.b16 %v75
    %v513 = vunpack.c.l.b16 %v76
    %v514 = vunpack.c.l.b16 %v77
    %v515 = vunpack.c.h.b16 %v77
    %v516 = vunpack.c.l.b16 %v78
    %v517 = vunpack.c.l.b16 %v79
    %v518 = vunpack.c.h.b16 %v79
    %v519 = vunpack.c.l.b16 %v80
    %v520 = vunpack.c.l.b16 %v81
    %v521 = vunpack.c.h.b16 %v81
    %v522 = vunpack.c.l.b16 %v82
    %v523 = vunpack.c.l.b16 %v83
    %v524 = vunpack.c.h.b16 %v83
    %v525 = vunpack.c.l.b16 %v84
    %v526 = vunpack.c.l.b16 %v85
    %v527 = vunpack.c.h.b16 %v85
    %v528 = vunpack.c.l.b16 %v86
    %v529 = vunpack.c.l.b16 %v87
    %v530 = vunpack.c.h.b16 %v87
    %v531 = vunpack.c.l.b16 %v88
    %v532 = vunpack.c.l.b16 %v89
    %v533 = vunpack.c.h.b16 %v89
    %v534 = vunpack.c.l.b16 %v90
    %v535 = vunpack.c.l.b16 %v91
    %v536 = vunpack.c.h.b16 %v91
    %v537 = vunpack.c.l.b16 %v92
    %v538 = vunpack.c.l.b16 %v93
    %v539 = vunpack.c.h.b16 %v93
    %v540 = vunpack.c.l.b16 %v94
    %v541 = vunpack.c.l.b16 %v95
    %v542 = vunpack.c.h.b16 %v95
    %v543 = vunpack.c.l.b16 %v96
    %v544 = vunpack.c.l.b16 %v97
    %v545 = vunpack.c.h.b16 %v97
    %v546 = vunpack.c.l.b16 %v98
    %v547 = vunpack.c.l.b16 %v99
    %v548 = vunpack.c.h.b16 %v99
    %v549 = vunpack.c.l.b16 %v100
    %v550 = vunpack.c.l.b16 %v101
    %v551 = vunpack.c.h.b16 %v101
    %v552 = vunpack.c.l.b16 %v102
    %v553 = vunpack.c.l.b16 %v103
    %v554 = vunpack.c.h.b16 %v103
    %v555 = vunpack.c.l.b16 %v104
    %v556 = vunpack.c.l.b16 %v105
    %v557 = vunpack.c.h.b16 %v105
    %v558 = vunpack.c.l.b16 %v106
    %v559 = vunpack.c.l.b16 %v107
    %v560 = vunpack.c.h.b16 %v107
    %v561 = vunpack.c.l.b16 %v108
    %v562 = vunpack.c.l.b16 %v109
    %v563 = vunpack.c.h.b16 %v109
    %v564 = vunpack.c.l.b16 %v110
    %v565 = vunpack.c.l.b16 %v111
    %v566 = vunpack.c.h.b16 %v111
    %v567 = vunpack.c.l.b16 %v112
    %v568 = vunpack.c.l.b16 %v113
    %v569 = vunpack.c.h.b16 %v113
    %v570 = vunpack.c.l.b16 %v114
    %v571 = vunpack.c.l.b16 %v115
    %v572 = vunpack.c.h.b16 %v115
    %v573 = vunpack.c.l.b16 %v116
    %v574 = vunpack.c.l.b16 %v117
    %v575 = vunpack.c.h.b16 %v117
    %v576 = vunpack.c.l.b16 %v118
    %v577 = vunpack.c.l.b16 %v119
    %v578 = vunpack.c.h.b16 %v119
    %v579 = vunpack.c.l.b16 %v120
    %v580 = vunpack.c.l.b16 %v121
    %v581 = vunpack.c.h.b16 %v121
    %v582 = vunpack.c.l.b16 %v122
    %v583 = vunpack.c.l.b16 %v123
    %v584 = vunpack.c.h.b16 %v123
    %v585 = vunpack.c.l.b16 %v124
    %v586 = vunpack.c.l.b16 %v125
    %v587 = vunpack.c.h.b16 %v125
    %v588 = vunpack.c.l.b16 %v126
    %v589 = vunpack.c.l.b16 %v127
    %v590 = vunpack.c.h.b16 %v127
    %v591 = vunpack.c.l.b16 %v128
    %v592 = vunpack.c.l.b16 %v129
    %v593 = vunpack.c.h.b16 %v129
    %v594 = vunpack.c.l.b16 %v130
    %v595 = vunpack.c.l.b16 %v131
    %v596 = vunpack.c.h.b16 %v131
    %v597 = vunpack.c.l.b16 %v132
    %v598 = vunpack.c.l.b16 %v133
    %v599 = vunpack.c.h.b16 %v133
    %v600 = vunpack.c.l.b16 %v134
    %v601 = vunpack.c.l.b16 %v135
    %v602 = vunpack.c.h.b16 %v135
    %v603 = vunpack.c.l.b16 %v136
    %v604 = vunpack.c.l.b16 %v137
    %v605 = vunpack.c.h.b16 %v137
    %v606 = vunpack.c.l.b16 %v138
    %v607 = vunpack.c.l.b16 %v139
    %v608 = vunpack.c.h.b16 %v139
    %v609 = vunpack.c.l.b16 %v140
    %v610 = vunpack.c.l.b16 %v141
    %v611 = vunpack.c.h.b16 %v141
    %v612 = vunpack.c.l.b16 %v142
    %v613 = vunpack.c.l.b16 %v143
    %v614 = vunpack.c.h.b16 %v143
    %v615 = vunpack.c.l.b16 %v144
    %v616 = vunpack.c.l.b16 %v145
    %v617 = vunpack.c.h.b16 %v145
    %v618 = vunpack.c.l.b16 %v146
    %v619 = vunpack.c.l.b16 %v147
    %v620 = vunpack.c.h.b16 %v147
    %v621 = vunpack.c.l.b16 %v148
    %v622 = vunpack.c.l.b16 %v149
    %v623 = vunpack.c.h.b16 %v149
    %v624 = vunpack.c.l.b16 %v150
    %v625 = vunpack.c.l.b16 %v151
    %v626 = vunpack.c.h.b16 %v151
    %v627 = vunpack.c.l.b16 %v152
    %v628 = vunpack.c.l.b16 %v153
    %v629 = vunpack.c.h.b16 %v153
    %v630 = vunpack.c.l.b16 %v154
    %v631 = vunpack.c.l.b16 %v155
    %v632 = vunpack.c.h.b16 %v155
    %v633 = vunpack.c.l.b16 %v156
    %v634 = vunpack.c.l.b16 %v157
    %v635 = vunpack.c.h.b16 %v157
    %v636 = vunpack.c.l.b16 %v158
    %v637 = vunpack.c.l.b16 %v159
    %v638 = vunpack.c.h.b16 %v159
    %v639 = vunpack.c.l.b16 %v160
    %v640 = vunpack.c.l.b16 %v161
    %v641 = vunpack.c.h.b16 %v161
    %v642 = vunpack.c.l.b16 %v162
    %v643 = vunpack.c.l.b16 %v163
    %v644 = vunpack.c.h.b16 %v163
    %v645 = vunpack.c.l.b16 %v164
    %v646 = vunpack.c.l.b16 %v165
    %v647 = vunpack.c.h.b16 %v165
    %v648 = vunpack.c.l.b16 %v166
    %v649 = vunpack.c.l.b16 %v167
    %v650 = vunpack.c.h.b16 %v167
    %v651 = vunpack.c.l.b16 %v168
    %v652 = vunpack.c.l.b16 %v169
    %v653 = vunpack.c.h.b16 %v169
    %v654 = vunpack.c.l.b16 %v170
    %v655 = vunpack.c.l.b16 %v171
    %v656 = vunpack.c.h.b16 %v171
    %v657 = vunpack.c.l.b16 %v172
    %v658 = vunpack.c.l.b16 %v173
    %v659 = vunpack.c.h.b16 %v173
    %v660 = vunpack.c.l.b16 %v174
    %v661 = vunpack.c.l.b16 %v175
    %v662 = vunpack.c.h.b16 %v175
    %v663 = vunpack.c.l.b16 %v176
    %v664 = vunpack.c.l.b16 %v177
    %v665 = vunpack.c.h.b16 %v177
    %v666 = vunpack.c.l.b16 %v178
    %v667 = vunpack.c.l.b16 %v179
    %v668 = vunpack.c.h.b16 %v179
    %v669 = vunpack.c.l.b16 %v180
    %v670 = vunpack.c.l.b16 %v181
    %v671 = vunpack.c.h.b16 %v181
    %v672 = vunpack.c.l.b16 %v182
    %v673 = vunpack.c.l.b16 %v183
    %v674 = vunpack.c.h.b16 %v183
    %v675 = vunpack.c.l.b16 %v184
    %v676 = vunpack.c.l.b16 %v185
    %v677 = vunpack.c.h.b16 %v185
    %v678 = vunpack.c.l.b16 %v186
    %v679 = vunpack.c.l.b16 %v187
    %v680 = vunpack.c.h.b16 %v187
    %v681 = vunpack.c.l.b16 %v188
    %v682 = vunpack.c.l.b16 %v189
    %v683 = vunpack.c.h.b16 %v189
    %v684 = vunpack.c.l.b16 %v190
    %v685 = vunpack.c.l.b16 %v191
    %v686 = vunpack.c.h.b16 %v191
    %v687 = vunpack.c.l.b16 %v192
    %v688 = vunpack.c.l.b16 %v193
    %v689 = vunpack.c.h.b16 %v193
    %v690 = vunpack.c.l.b16 %v194
    %v691 = vunpack.c.l.b16 %v195
    %v692 = vunpack.c.h.b16 %v195
    %v693 = vunpack.c.l.b16 %v196
    %v694 = vunpack.c.l.b16 %v197
    %v695 = vunpack.c.h.b16 %v197
    %v696 = vunpack.c.l.b16 %v198
    %v697 = vunpack.c.l.b16 %v199
    %v698 = vunpack.c.h.b16 %v199
    %v699 = vunpack.c.l.b16 %v200
    %v700 = vunpack.c.l.b16 %v201
    %v701 = vunpack.c.h.b16 %v201
    %v702 = vunpack.c.l.b16 %v202
    %v703 = vunpack.c.l.b16 %v203
    %v704 = vunpack.c.h.b16 %v203
    %v705 = vunpack.c.l.b16 %v204
    %v706 = vunpack.c.l.b16 %v205
    %v707 = vunpack.c.h.b16 %v205
    %v708 = vunpack.c.l.b16 %v206
    %v709 = vunpack.c.l.b16 %v207
    %v710 = vunpack.c.h.b16 %v207
    %v711 = vunpack.c.l.b16 %v208
    %v712 = vunpack.c.l.b16 %v209
    %v713 = vunpack.c.h.b16 %v209
    %v714 = vunpack.c.l.b16 %v210
    %v715 = vunpack.c.l.b16 %v211
    %v716 = vunpack.c.h.b16 %v211
    %v717 = vunpack.c.l.b16 %v212
    %v718 = vunpack.c.l.b16 %v213
    %v719 = vunpack.c.h.b16 %v213
    %v720 = vunpack.c.l.b16 %v214
    %v721 = vunpack.c.l.b16 %v215
    %v722 = vunpack.c.h.b16 %v215
    %v723 = vunpack.c.l.b16 %v216
    %v724 = vunpack.c.l.b16 %v217
    %v725 = vunpack.c.h.b16 %v217
    %v726 = vunpack.c.l.b16 %v218
    %v727 = vunpack.c.l.b16 %v219
    %v728 = vunpack.c.h.b16 %v219
    %v729 = vunpack.c.l.b16 %v220
    %v730 = vunpack.c.l.b16 %v221
    %v731 = vunpack.c.h.b16 %v221
    %v732 = vunpack.c.l.b16 %v222
    %v733 = vunpack.c.l.b16 %v223
    %v734 = vunpack.c.h.b16 %v223
    %v735 = vunpack.c.l.b16 %v224
    %v736 = vunpack.c.l.b16 %v225
    %v737 = vunpack.c.h.b16 %v225
    %v738 = vunpack.c.l.b16 %v226
    %v739 = vunpack.c.l.b16 %v227
    %v740 = vunpack.c.h.b16 %v227
    %v741 = vunpack.c.l.b16 %v228
    %v742 = vpack.c.b16 %v451, %v448
    %v743 = vpack.c.b16 %v452, %v449
    %v744 = vpack.c.b16 %v453, %v450
    %v745 = vpack.c.b16 %v457, %v454
    %v746 = vpack.c.b16 %v458, %v455
    %v747 = vpack.c.b16 %v459, %v456
    %v748 = vpack.c.b16 %v463, %v460
    %v749 = vpack.c.b16 %v464, %v461
    %v750 = vpack.c.b16 %v465, %v462
    %v751 = vpack.c.b16 %v469, %v466
    %v752 = vpack.c.b16 %v470, %v467
    %v753 = vpack.c.b16 %v471, %v468
    %v754 = vpack.c.b16 %v475, %v472
    %v755 = vpack.c.b16 %v476, %v473
    %v756 = vpack.c.b16 %v477, %v474
    %v757 = vpack.c.b16 %v481, %v478
    %v758 = vpack.c.b16 %v482, %v479
    %v759 = vpack.c.b16 %v483, %v480
    %v760 = vpack.c.b16 %v487, %v484
    %v761 = vpack.c.b16 %v488, %v485
    %v762 = vpack.c.b16 %v489, %v486
    %v763 = vpack.c.b16 %v493, %v490
    %v764 = vpack.c.b16 %v494, %v491
    %v765 = vpack.c.b16 %v495, %v492
    %v766 = vpack.c.b16 %v499, %v496
    %v767 = vpack.c.b16 %v500, %v497
    %v768 = vpack.c.b16 %v501, %v498
    %v769 = vpack.c.b16 %v505, %v502
    %v770 = vpack.c.b16 %v506, %v503
    %v771 = vpack.c.b16 %v507, %v504
    %v772 = vpack.c.b16 %v511, %v508
    %v773 = vpack.c.b16 %v512, %v509
    %v774 = vpack.c.b16 %v513, %v510
    %v775 = vpack.c.b16 %v517, %v514
    %v776 = vpack.c.b16 %v518, %v515
    %v777 = vpack.c.b16 %v519, %v516
    %v778 = vpack.c.b16 %v523, %v520
    %v779 = vpack.c.b16 %v524, %v521
    %v780 = vpack.c.b16 %v525, %v522
    %v781 = vpack.c.b16 %v529, %v526
    %v782 = vpack.c.b16 %v530, %v527
    %v783 = vpack.c.b16 %v531, %v528
    %v784 = vpack.c.b16 %v535, %v532
    %v785 = vpack.c.b16 %v536, %v533
    %v786 = vpack.c.b16 %v537, %v534
    %v787 = vpack.c.b16 %v541, %v538
    %v788 = vpack.c.b16 %v542, %v539
    %v789 = vpack.c.b16 %v543, %v540
    %v790 = vpack.c.b16 %v547, %v544
    %v791 = vpack.c.b16 %v548, %v545
    %v792 = vpack.c.b16 %v549, %v546
    %v793 = vpack.c.b16 %v553, %v550
    %v794 = vpack.c.b16 %v554, %v551
    %v795 = vpack.c.b16 %v555, %v552
    %v796 = vpack.c.b16 %v559, %v556
    %v797 = vpack.c.b16 %v560, %v557
    %v798 = vpack.c.b16 %v561, %v558
    %v799 = vpack.c.b16 %v565, %v562
    %v800 = vpack.c.b16 %v566, %v563
    %v801 = vpack.c.b16 %v567, %v564
    %v802 = vpack.c.b16 %v571, %v568
    %v803 = vpack.c.b16 %v572, %v569
    %v804 = vpack.c.b16 %v573, %v570
    %v805 = vpack.c.b16 %v577, %v574
    %v806 = vpack.c.b16 %v578, %v575
    %v807 = vpack.c.b16 %v579, %v576
    %v808 = vpack.c.b16 %v583, %v580
    %v809 = vpack.c.b16 %v584, %v581
    %v810 = vpack.c.b16 %v585, %v582
    %v811 = vpack.c.b16 %v589, %v586
    %v812 = vpack.c.b16 %v590, %v587
    %v813 = vpack.c.b16 %v591, %v588
    %v814 = vpack.c.b16 %v595, %v592
    %v815 = vpack.c.b16 %v596, %v593
    %v816 = vpack.c.b16 %v597, %v594
    %v817 = vpack.c.b16 %v601, %v598
    %v818 = vpack.c.b16 %v602, %v599
    %v819 = vpack.c.b16 %v603, %v600
    %v820 = vpack.c.b16 %v607, %v604
    %v821 = vpack.c.b16 %v608, %v605
    %v822 = vpack.c.b16 %v609, %v606
    %v823 = vpack.c.b16 %v613, %v610
    %v824 = vpack.c.b16 %v614, %v611
    %v825 = vpack.c.b16 %v615, %v612
    %v826 = vpack.c.b16 %v619, %v616
    %v827 = vpack.c.b16 %v620, %v617
    %v828 = vpack.c.b16 %v621, %v618
    %v829 = vpack.c.b16 %v625, %v622
    %v830 = vpack.c.b16 %v626, %v623
    %v831 = vpack.c.b16 %v627, %v624
    %v832 = vpack.c.b16 %v631, %v628
    %v833 = vpack.c.b16 %v632, %v629
    %v834 = vpack.c.b16 %v633, %v630
    %v835 = vpack.c.b16 %v637, %v634
    %v836 = vpack.c.b16 %v638, %v635
    %v837 = vpack.c.b16 %v639, %v636
    %v838 = vpack.c.b16 %v643, %v640
    %v839 = vpack.c.b16 %v644, %v641
    %v840 = vpack.c.b16 %v645, %v642
    %v841 = vpack.c.b16 %v649, %v646
    %v842 = vpack.c.b16 %v650, %v647
    %v843 = vpack.c.b16 %v651, %v648
    %v844 = vpack.c.b16 %v655, %v652
    %v845 = vpack.c.b16 %v656, %v653
    %v846 = vpack.c.b16 %v657, %v654
    %v847 = vpack.c.b16 %v661, %v658
    %v848 = vpack.c.b16 %v662, %v659
    %v849 = vpack.c.b16 %v663, %v660
    %v850 = vpack.c.b16 %v667, %v664
    %v851 = vpack.c.b16 %v668, %v665
    %v852 = vpack.c.b16 %v669, %v666
    %v853 = vpack.c.b16 %v673, %v670
    %v854 = vpack.c.b16 %v674, %v671
    %v855 = vpack.c.b16 %v675, %v672
    %v856 = vpack.c.b16 %v679, %v676
    %v857 = vpack.c.b16 %v680, %v677
    %v858 = vpack.c.b16 %v681, %v678
    %v859 = vpack.c.b16 %v685, %v682
    %v860 = vpack.c.b16 %v686, %v683
    %v861 = vpack.c.b16 %v687, %v684
    %v862 = vpack.c.b16 %v691, %v688
    %v863 = vpack.c.b16 %v692, %v689
    %v864 = vpack.c.b16 %v693, %v690
    %v865 = vpack.c.b16 %v697, %v694
    %v866 = vpack.c.b16 %v698, %v695
    %v867 = vpack.c.b16 %v699, %v696
    %v868 = vpack.c.b16 %v703, %v700
    %v869 = vpack.c.b16 %v704, %v701
    %v870 = vpack.c.b16 %v705, %v702
    %v871 = vpack.c.b16 %v709, %v706
    %v872 = vpack.c.b16 %v710, %v707
    %v873 = vpack.c.b16 %v711, %v708
    %v874 = vpack.c.b16 %v715, %v712
    %v875 = vpack.c.b16 %v716, %v713
    %v876 = vpack.c.b16 %v717, %v714
    %v877 = vpack.c.b16 %v721, %v718
    %v878 = vpack.c.b16 %v722, %v719
    %v879 = vpack.c.b16 %v723, %v720
    %v880 = vpack.c.b16 %v727, %v724
    %v881 = vpack.c.b16 %v728, %v725
    %v882 = vpack.c.b16 %v729, %v726
    %v883 = vpack.c.b16 %v733, %v730
    %v884 = vpack.c.b16 %v734, %v731
    %v885 = vpack.c.b16 %v735, %v732
    %v886 = vpack.c.b16 %v739, %v736
    %v887 = vpack.c.b16 %v740, %v737
    %v888 = vpack.c.b16 %v741, %v738
    %vm1036 = vcmask 130048
    %v1037 = vsel %vm1036, %v245, 0
    %1039 = vmatpush.bf16.msra.mxu0 %v763
    %1040 = vmatpush.bf16.msra.mxu0 %v760
    %1041 = vmatpush.bf16.msra.mxu0 %v757
    %1042 = vmatpush.bf16.msra.mxu0 %v754
    %1043 = vmatpush.bf16.msra.mxu0 %v751
    %1044 = vmatpush.bf16.msra.mxu0 %v748
    %1045 = vmatpush.bf16.msra.mxu0 %v745
    %1046 = vmatpush.bf16.msra.mxu0 %v742
    %1047 = vmatmul.bf16.gmra.mxu0 %v239
    %v1048 = vpop.f32.mrf.mxu0
    %v1049 = vadd.f32 %v231, %v1048
    %v1050 = vpop.f32.mrf.mxu0
    %1051 = vdwg.mxu0
    %1052 = vmatpush.bf16.msra.mxu0 %v787
    %1053 = vmatpush.bf16.msra.mxu0 %v784
    %1054 = vmatpush.bf16.msra.mxu0 %v781
    %1055 = vmatpush.bf16.msra.mxu0 %v778
    %1056 = vmatpush.bf16.msra.mxu0 %v775
    %1057 = vmatpush.bf16.msra.mxu0 %v772
    %1058 = vmatpush.bf16.msra.mxu0 %v769
    %1059 = vmatpush.bf16.msra.mxu0 %v766
    %1060 = vmatmul.bf16.gmra.mxu0 %v240
    %v1061 = vpop.f32.mrf.mxu0
    %v1062 = vadd.f32 %v1049, %v1061
    %v1063 = vpop.f32.mrf.mxu0
    %1064 = vdwg.mxu0
    %1065 = vmatpush.bf16.msra.mxu0 %v811
    %1066 = vmatpush.bf16.msra.mxu0 %v808
    %1067 = vmatpush.bf16.msra.mxu0 %v805
    %1068 = vmatpush.bf16.msra.mxu0 %v802
    %1069 = vmatpush.bf16.msra.mxu0 %v799
    %1070 = vmatpush.bf16.msra.mxu0 %v796
    %1071 = vmatpush.bf16.msra.mxu0 %v793
    %1072 = vmatpush.bf16.msra.mxu0 %v790
    %1073 = vmatmul.bf16.gmra.mxu0 %v241
    %v1074 = vpop.f32.mrf.mxu0
    %v1075 = vadd.f32 %v1062, %v1074
    %v1076 = vpop.f32.mrf.mxu0
    %1077 = vdwg.mxu0
    %1078 = vmatpush.bf16.msra.mxu0 %v835
    %1079 = vmatpush.bf16.msra.mxu0 %v832
    %1080 = vmatpush.bf16.msra.mxu0 %v829
    %1081 = vmatpush.bf16.msra.mxu0 %v826
    %1082 = vmatpush.bf16.msra.mxu0 %v823
    %1083 = vmatpush.bf16.msra.mxu0 %v820
    %1084 = vmatpush.bf16.msra.mxu0 %v817
    %1085 = vmatpush.bf16.msra.mxu0 %v814
    %1086 = vmatmul.bf16.gmra.mxu0 %v242
    %v1087 = vpop.f32.mrf.mxu0
    %v1088 = vadd.f32 %v1075, %v1087
    %v1089 = vpop.f32.mrf.mxu0
    %1090 = vdwg.mxu0
    %1091 = vmatpush.bf16.msra.mxu0 %v859
    %1092 = vmatpush.bf16.msra.mxu0 %v856
    %1093 = vmatpush.bf16.msra.mxu0 %v853
    %1094 = vmatpush.bf16.msra.mxu0 %v850
    %1095 = vmatpush.bf16.msra.mxu0 %v847
    %1096 = vmatpush.bf16.msra.mxu0 %v844
    %1097 = vmatpush.bf16.msra.mxu0 %v841
    %1098 = vmatpush.bf16.msra.mxu0 %v838
    %1099 = vmatmul.bf16.gmra.mxu0 %v243
    %v1100 = vpop.f32.mrf.mxu0
    %v1101 = vadd.f32 %v1088, %v1100
    %v1102 = vpop.f32.mrf.mxu0
    %1103 = vdwg.mxu0
    %1104 = vmatpush.bf16.msra.mxu0 %v883
    %1105 = vmatpush.bf16.msra.mxu0 %v880
    %1106 = vmatpush.bf16.msra.mxu0 %v877
    %1107 = vmatpush.bf16.msra.mxu0 %v874
    %1108 = vmatpush.bf16.msra.mxu0 %v871
    %1109 = vmatpush.bf16.msra.mxu0 %v868
    %1110 = vmatpush.bf16.msra.mxu0 %v865
    %1111 = vmatpush.bf16.msra.mxu0 %v862
    %1112 = vmatmul.bf16.gmra.mxu0 %v244
    %v1113 = vpop.f32.mrf.mxu0
    %v1114 = vadd.f32 %v1101, %v1113
    %v1115 = vpop.f32.mrf.mxu0
    %1116 = vdwg.mxu0
    %1117 = vmatpush.bf16.msra.mxu0 0
    %1118 = vmatpush.bf16.msra.mxu0 0
    %1119 = vmatpush.bf16.msra.mxu0 0
    %1120 = vmatpush.bf16.msra.mxu0 0
    %1121 = vmatpush.bf16.msra.mxu0 0
    %1122 = vmatpush.bf16.msra.mxu0 0
    %1123 = vmatpush.bf16.msra.mxu0 0
    %1124 = vmatpush.bf16.msra.mxu0 %v886
    %1125 = vmatmul.bf16.gmra.mxu0 %v1037
    %v1126 = vpop.f32.mrf.mxu0
    %v1127 = vadd.f32 %v1114, %v1126
    %v1128 = vpop.f32.mrf.mxu0
    %1129 = vdwg.mxu0
    %1130 = vmatpush.bf16.msra.mxu0 %v764
    %1131 = vmatpush.bf16.msra.mxu0 %v761
    %1132 = vmatpush.bf16.msra.mxu0 %v758
    %1133 = vmatpush.bf16.msra.mxu0 %v755
    %1134 = vmatpush.bf16.msra.mxu0 %v752
    %1135 = vmatpush.bf16.msra.mxu0 %v749
    %1136 = vmatpush.bf16.msra.mxu0 %v746
    %1137 = vmatpush.bf16.msra.mxu0 %v743
    %1138 = vmatmul.bf16.gmra.mxu0 %v239
    %v1139 = vpop.f32.mrf.mxu0
    %v1140 = vadd.f32 %v232, %v1139
    %v1141 = vpop.f32.mrf.mxu0
    %1142 = vdwg.mxu0
    %1143 = vmatpush.bf16.msra.mxu0 %v788
    %1144 = vmatpush.bf16.msra.mxu0 %v785
    %1145 = vmatpush.bf16.msra.mxu0 %v782
    %1146 = vmatpush.bf16.msra.mxu0 %v779
    %1147 = vmatpush.bf16.msra.mxu0 %v776
    %1148 = vmatpush.bf16.msra.mxu0 %v773
    %1149 = vmatpush.bf16.msra.mxu0 %v770
    %1150 = vmatpush.bf16.msra.mxu0 %v767
    %1151 = vmatmul.bf16.gmra.mxu0 %v240
    %v1152 = vpop.f32.mrf.mxu0
    %v1153 = vadd.f32 %v1140, %v1152
    %v1154 = vpop.f32.mrf.mxu0
    %1155 = vdwg.mxu0
    %1156 = vmatpush.bf16.msra.mxu0 %v812
    %1157 = vmatpush.bf16.msra.mxu0 %v809
    %1158 = vmatpush.bf16.msra.mxu0 %v806
    %1159 = vmatpush.bf16.msra.mxu0 %v803
    %1160 = vmatpush.bf16.msra.mxu0 %v800
    %1161 = vmatpush.bf16.msra.mxu0 %v797
    %1162 = vmatpush.bf16.msra.mxu0 %v794
    %1163 = vmatpush.bf16.msra.mxu0 %v791
    %1164 = vmatmul.bf16.gmra.mxu0 %v241
    %v1165 = vpop.f32.mrf.mxu0
    %v1166 = vadd.f32 %v1153, %v1165
    %v1167 = vpop.f32.mrf.mxu0
    %1168 = vdwg.mxu0
    %1169 = vmatpush.bf16.msra.mxu0 %v836
    %1170 = vmatpush.bf16.msra.mxu0 %v833
    %1171 = vmatpush.bf16.msra.mxu0 %v830
    %1172 = vmatpush.bf16.msra.mxu0 %v827
    %1173 = vmatpush.bf16.msra.mxu0 %v824
    %1174 = vmatpush.bf16.msra.mxu0 %v821
    %1175 = vmatpush.bf16.msra.mxu0 %v818
    %1176 = vmatpush.bf16.msra.mxu0 %v815
    %1177 = vmatmul.bf16.gmra.mxu0 %v242
    %v1178 = vpop.f32.mrf.mxu0
    %v1179 = vadd.f32 %v1166, %v1178
    %v1180 = vpop.f32.mrf.mxu0
    %1181 = vdwg.mxu0
    %1182 = vmatpush.bf16.msra.mxu0 %v860
    %1183 = vmatpush.bf16.msra.mxu0 %v857
    %1184 = vmatpush.bf16.msra.mxu0 %v854
    %1185 = vmatpush.bf16.msra.mxu0 %v851
    %1186 = vmatpush.bf16.msra.mxu0 %v848
    %1187 = vmatpush.bf16.msra.mxu0 %v845
    %1188 = vmatpush.bf16.msra.mxu0 %v842
    %1189 = vmatpush.bf16.msra.mxu0 %v839
    %1190 = vmatmul.bf16.gmra.mxu0 %v243
    %v1191 = vpop.f32.mrf.mxu0
    %v1192 = vadd.f32 %v1179, %v1191
    %v1193 = vpop.f32.mrf.mxu0
    %1194 = vdwg.mxu0
    %1195 = vmatpush.bf16.msra.mxu0 %v884
    %1196 = vmatpush.bf16.msra.mxu0 %v881
    %1197 = vmatpush.bf16.msra.mxu0 %v878
    %1198 = vmatpush.bf16.msra.mxu0 %v875
    %1199 = vmatpush.bf16.msra.mxu0 %v872
    %1200 = vmatpush.bf16.msra.mxu0 %v869
    %1201 = vmatpush.bf16.msra.mxu0 %v866
    %1202 = vmatpush.bf16.msra.mxu0 %v863
    %1203 = vmatmul.bf16.gmra.mxu0 %v244
    %v1204 = vpop.f32.mrf.mxu0
    %v1205 = vadd.f32 %v1192, %v1204
    %v1206 = vpop.f32.mrf.mxu0
    %1207 = vdwg.mxu0
    %1208 = vmatpush.bf16.msra.mxu0 0
    %1209 = vmatpush.bf16.msra.mxu0 0
    %1210 = vmatpush.bf16.msra.mxu0 0
    %1211 = vmatpush.bf16.msra.mxu0 0
    %1212 = vmatpush.bf16.msra.mxu0 0
    %1213 = vmatpush.bf16.msra.mxu0 0
    %1214 = vmatpush.bf16.msra.mxu0 0
    %1215 = vmatpush.bf16.msra.mxu0 %v887
    %1216 = vmatmul.bf16.gmra.mxu0 %v1037
    %v1217 = vpop.f32.mrf.mxu0
    %v1218 = vadd.f32 %v1205, %v1217
    %v1219 = vpop.f32.mrf.mxu0
    %1220 = vdwg.mxu0
    %1221 = vmatpush.bf16.msra.mxu0 %v765
    %1222 = vmatpush.bf16.msra.mxu0 %v762
    %1223 = vmatpush.bf16.msra.mxu0 %v759
    %1224 = vmatpush.bf16.msra.mxu0 %v756
    %1225 = vmatpush.bf16.msra.mxu0 %v753
    %1226 = vmatpush.bf16.msra.mxu0 %v750
    %1227 = vmatpush.bf16.msra.mxu0 %v747
    %1228 = vmatpush.bf16.msra.mxu0 %v744
    %1229 = vmatmul.bf16.gmra.mxu0 %v239
    %v1230 = vpop.f32.mrf.mxu0
    %v1231 = vadd.f32 %v233, %v1230
    %v1232 = vpop.f32.mrf.mxu0
    %1233 = vdwg.mxu0
    %1234 = vmatpush.bf16.msra.mxu0 %v789
    %1235 = vmatpush.bf16.msra.mxu0 %v786
    %1236 = vmatpush.bf16.msra.mxu0 %v783
    %1237 = vmatpush.bf16.msra.mxu0 %v780
    %1238 = vmatpush.bf16.msra.mxu0 %v777
    %1239 = vmatpush.bf16.msra.mxu0 %v774
    %1240 = vmatpush.bf16.msra.mxu0 %v771
    %1241 = vmatpush.bf16.msra.mxu0 %v768
    %1242 = vmatmul.bf16.gmra.mxu0 %v240
    %v1243 = vpop.f32.mrf.mxu0
    %v1244 = vadd.f32 %v1231, %v1243
    %v1245 = vpop.f32.mrf.mxu0
    %1246 = vdwg.mxu0
    %1247 = vmatpush.bf16.msra.mxu0 %v813
    %1248 = vmatpush.bf16.msra.mxu0 %v810
    %1249 = vmatpush.bf16.msra.mxu0 %v807
    %1250 = vmatpush.bf16.msra.mxu0 %v804
    %1251 = vmatpush.bf16.msra.mxu0 %v801
    %1252 = vmatpush.bf16.msra.mxu0 %v798
    %1253 = vmatpush.bf16.msra.mxu0 %v795
    %1254 = vmatpush.bf16.msra.mxu0 %v792
    %1255 = vmatmul.bf16.gmra.mxu0 %v241
    %v1256 = vpop.f32.mrf.mxu0
    %v1257 = vadd.f32 %v1244, %v1256
    %v1258 = vpop.f32.mrf.mxu0
    %1259 = vdwg.mxu0
    %1260 = vmatpush.bf16.msra.mxu0 %v837
    %1261 = vmatpush.bf16.msra.mxu0 %v834
    %1262 = vmatpush.bf16.msra.mxu0 %v831
    %1263 = vmatpush.bf16.msra.mxu0 %v828
    %1264 = vmatpush.bf16.msra.mxu0 %v825
    %1265 = vmatpush.bf16.msra.mxu0 %v822
    %1266 = vmatpush.bf16.msra.mxu0 %v819
    %1267 = vmatpush.bf16.msra.mxu0 %v816
    %1268 = vmatmul.bf16.gmra.mxu0 %v242
    %v1269 = vpop.f32.mrf.mxu0
    %v1270 = vadd.f32 %v1257, %v1269
    %v1271 = vpop.f32.mrf.mxu0
    %1272 = vdwg.mxu0
    %1273 = vmatpush.bf16.msra.mxu0 %v861
    %1274 = vmatpush.bf16.msra.mxu0 %v858
    %1275 = vmatpush.bf16.msra.mxu0 %v855
    %1276 = vmatpush.bf16.msra.mxu0 %v852
    %1277 = vmatpush.bf16.msra.mxu0 %v849
    %1278 = vmatpush.bf16.msra.mxu0 %v846
    %1279 = vmatpush.bf16.msra.mxu0 %v843
    %1280 = vmatpush.bf16.msra.mxu0 %v840
    %1281 = vmatmul.bf16.gmra.mxu0 %v243
    %v1282 = vpop.f32.mrf.mxu0
    %v1283 = vadd.f32 %v1270, %v1282
    %v1284 = vpop.f32.mrf.mxu0
    %1285 = vdwg.mxu0
    %1286 = vmatpush.bf16.msra.mxu0 %v885
    %1287 = vmatpush.bf16.msra.mxu0 %v882
    %1288 = vmatpush.bf16.msra.mxu0 %v879
    %1289 = vmatpush.bf16.msra.mxu0 %v876
    %1290 = vmatpush.bf16.msra.mxu0 %v873
    %1291 = vmatpush.bf16.msra.mxu0 %v870
    %1292 = vmatpush.bf16.msra.mxu0 %v867
    %1293 = vmatpush.bf16.msra.mxu0 %v864
    %1294 = vmatmul.bf16.gmra.mxu0 %v244
    %v1295 = vpop.f32.mrf.mxu0
    %v1296 = vadd.f32 %v1283, %v1295
    %v1297 = vpop.f32.mrf.mxu0
    %1298 = vdwg.mxu0
    %1299 = vmatpush.bf16.msra.mxu0 0
    %1300 = vmatpush.bf16.msra.mxu0 0
    %1301 = vmatpush.bf16.msra.mxu0 0
    %1302 = vmatpush.bf16.msra.mxu0 0
    %1303 = vmatpush.bf16.msra.mxu0 0
    %1304 = vmatpush.bf16.msra.mxu0 0
    %1305 = vmatpush.bf16.msra.mxu0 0
    %1306 = vmatpush.bf16.msra.mxu0 %v888
    %1307 = vmatmul.bf16.gmra.mxu0 %v1037
    %v1308 = vpop.f32.mrf.mxu0
    %v1309 = vadd.f32 %v1296, %v1308
    %v1310 = vpop.f32.mrf.mxu0
    %1311 = vdwg.mxu0
    %v1312 = vmax.f32 %v1127, 0.0
    %v1313 = vmax.f32 %v1218, 0.0
    %v1314 = vmax.f32 %v1309, 0.0
    %v1318 = vrot.slane %v1313, 6
    %v1319 = vrot.slane %v1314, 4
    %vm1320 = vcmask 1041408
    %v1321 = vsel %vm1320, %v1312, %v1318
    %vm1322 = vcmask 1043456
    %v1323 = vsel %vm1322, %v1321, %v1319
    %1325 = vst [vmem:[#allocation5] sm:$0x3f] %v1323
    // Predicated region
    $region18: #{net_forward.1} parent=1 // pred_check
      _
    $region19: #{net_forward.1} parent=1 // pred_check_branch
      %1327 = sbr.rel (0) target = $region21
    $region20: #{net_forward.1} parent=1 // pred_region
      %1329 = vsyncadd [#allocation4], 0
      %s1331 = sshll.u32 [#allocation5], 4
      %s1332 = int_to_ptr.vmem [resolvable:$true] %s1331
      %s1333 = sshll.u32 %s3, 4
      %s1334 = int_to_ptr.hbm [resolvable:$true] %s1333
      %1336 = dma.vmem_to_hbm [thread:$0]  %s1332, 96, %s1334, [#allocation4]
    $region21: #{net_forward.1} parent=1 // pred_fallthru
      _
    // Predicated region
    $region22: #{net_forward.1} parent=1 // pred_check
      _
    $region23: #{net_forward.1} parent=1 // pred_check_branch
      %1338 = sbr.rel (0) target = $region25
    $region24: #{net_forward.1} parent=1 // pred_region
      %1340 = dma.done [#allocation4], 96
    $region25: #{net_forward.1} parent=1 // pred_fallthru
      _
    %1341 = vsyncpa [#allocation3], 1
    %1342 = vsyncpa [#allocation4], 1

</llo_original>
